<compile_context>
chip_gen: v6e
topology: v6e:2x2x1
jax: 0.10.0
libtpu: 0.0.40
codegen_flags: <defaults>
</compile_context>

<pallas_src>
import jax
import jax.numpy as jnp
from jax.experimental import pallas as pl
from jax.experimental.pallas import tpu as pltpu

LANE = 128


def _cdiv(a, b):
    return -(-a // b)


def _round_up(x, m):
    return _cdiv(x, m) * m


def _cnn_kernel(x_ref, w_ref, b_ref, o_ref):
    # x_ref: (TB, Lout_pad, K*Cin) bf16  im2col windows; rows >= Lout are
    #        edge-replicated valid windows, so the max is unaffected.
    # w_ref: (K*Cin, Cout_pad)     bf16  (Cout zero-padded to 128 lanes)
    # b_ref: (1, Cout_pad)         f32
    # o_ref: (TB, Cout_pad)        f32
    tb, lp, kc = x_ref.shape
    cout_pad = w_ref.shape[1]

    # Lout_pad is a multiple of 16 (bf16 sublane packing), so collapsing the
    # leading dims is a pure reinterpretation (no relayout).
    lhs = x_ref[...].reshape(tb * lp, kc)                       # (TB*Lp, K*Cin) bf16

    # Conv1d for every output position of every sample in ONE MXU dot
    # (contraction = K*Cin), f32 accumulation.
    scores = jnp.dot(lhs, w_ref[...],
                     preferred_element_type=jnp.float32)        # (TB*Lp, Cout_pad) f32

    # AdaptiveMaxPool1d(1) over the length axis.
    pooled = jnp.max(scores.reshape(tb, lp, cout_pad), axis=1)  # (TB, Cout_pad)

    # Bias + ReLU after the pool (exact: both are monotone in the score).
    o_ref[...] = jnp.maximum(pooled + b_ref[...], 0.0)


def cnn_forward(x_ncl, weight, bias, *, padding=1, block_b=256):
    """x_ncl: [B, Cin, L] (PyTorch NCL). weight: [Cout, Cin, K]. bias: [Cout]."""
    B, Cin, L = x_ncl.shape
    Cout, Cin_w, K = weight.shape
    assert Cin_w == Cin
    Lout = L + 2 * padding - K + 1
    assert Lout >= 1, "sequence too short for this kernel_size/padding"

    Lout_pad = _round_up(Lout, 16)      # bf16 sublane-aligned conv-output length
    Cout_pad = _round_up(Cout, LANE)    # lane-dense output width
    KC = K * Cin                        # im2col contraction (e.g. 5*8 = 40)

    # --- Block sizing with PADDED VMEM accounting --------------------------
    # The x block's last dim (KC) occupies a full 128-lane tile in VMEM, so the
    # per-sample footprint is Lout_pad*128 lanes, not Lout_pad*KC:
    #   x (bf16, double-buffered) + f32 matmul result + f32 output block.
    bytes_per_sample = (2 * Lout_pad * LANE * 2        # x, 2 buffers, bf16
                        + Lout_pad * LANE * 4          # f32 scores intermediate
                        + 2 * LANE * 4)                # f32 output, 2 buffers
    vmem_budget = 12 << 20                              # stay under v5e's 16 MiB default
    block_b = max(8, min(block_b, (vmem_budget // bytes_per_sample) // 8 * 8))

    # Balanced blocks; keep >= 2 blocks when B > 8 so the "parallel" batch axis
    # actually splits across both v7x TensorCores (v5e/v6e: single TC, harmless).
    n_blocks = max(_cdiv(B, block_b), 2 if B > 8 else 1)
    TB = _round_up(_cdiv(B, n_blocks), 8)
    Bp = TB * n_blocks

    # --- Single fused glue pass over the activations ------------------------
    # NCL -> NLC, conv zero-padding, im2col window gather, edge-replicate the
    # Lout_pad-Lout alignment rows (valid windows -> max unchanged), bf16 cast.
    # TODO(synk): have the upstream producer emit this (Bp, Lout_pad, K*Cin)
    # bf16 layout directly to drop the remaining extra HBM pass.
    x_nlc = jnp.transpose(x_ncl, (0, 2, 1))                               # (B, L, Cin)
    x_pad = jnp.pad(x_nlc, ((0, Bp - B), (padding, padding), (0, 0)))     # (Bp, L+2p, Cin)
    win = jnp.stack([x_pad[:, k:k + Lout, :] for k in range(K)], axis=2)  # (Bp, Lout, K, Cin)
    win = win.reshape(Bp, Lout, KC)
    x_prep = jnp.pad(win, ((0, 0), (0, Lout_pad - Lout), (0, 0)),
                     mode="edge").astype(jnp.bfloat16)                    # (Bp, Lout_pad, KC)

    # Weight: (Cout, Cin, K) -> (K*Cin, Cout_pad) bf16 so that
    # w2d[k*Cin + c, co] == weight[co, c, k].  Bias -> (1, Cout_pad) f32.
    w2d = jnp.transpose(weight, (2, 1, 0)).reshape(KC, Cout)
    w2d = jnp.pad(w2d, ((0, 0), (0, Cout_pad - Cout))).astype(jnp.bfloat16)
    b_pad = jnp.pad(bias.astype(jnp.float32),
                    (0, Cout_pad - Cout)).reshape(1, Cout_pad)

    out = pl.pallas_call(
        _cnn_kernel,
        out_shape=jax.ShapeDtypeStruct((Bp, Cout_pad), jnp.float32),
        grid_spec=pltpu.PrefetchScalarGridSpec(
            num_scalar_prefetch=0,
            grid=(n_blocks,),
            in_specs=[
                pl.BlockSpec((TB, Lout_pad, KC), lambda i: (i, 0, 0)),
                pl.BlockSpec((KC, Cout_pad), lambda i: (0, 0)),
                pl.BlockSpec((1, Cout_pad), lambda i: (0, 0)),
            ],
            out_specs=pl.BlockSpec((TB, Cout_pad), lambda i: (i, 0)),
        ),
        compiler_params=pltpu.CompilerParams(
            dimension_semantics=("parallel",)),
    )(x_prep, w2d, b_pad)

    # TODO(synk): consumers that tolerate the padded (Bp, 128) layout (or bf16)
    # can skip this slice and save the extra copy pass.
    return out[:B, :Cout]


def _reference(x_ncl, weight, bias, *, padding=1):
    """Pure-JAX reference mirroring PyTorch conv1d + relu + adaptive max pool."""
    out = jax.lax.conv_general_dilated(
        x_ncl.astype(jnp.float32), weight.astype(jnp.float32),
        window_strides=(1,), padding=[(padding, padding)],
        dimension_numbers=("NCH", "OIH", "NCH"))
    out = out + bias.astype(jnp.float32)[None, :, None]
    out = jnp.maximum(out, 0.0)
    return jnp.max(out, axis=-1)                          # [B, Cout]


if __name__ == "__main__":
    # Small shapes consistent with the module.
    batch = 2
    char_embed_size = 8      # Cin
    word_embed_size = 16     # Cout
    seq_len = 16             # num_words
    kernel_size = 5
    padding = 1

    key = jax.random.PRNGKey(0)
    kx, kw, kb = jax.random.split(key, 3)

    x = jax.random.normal(kx, (batch, char_embed_size, seq_len), jnp.float32)
    fan_in = char_embed_size * kernel_size
    limit = (1.0 / fan_in) ** 0.5
    weight = jax.random.uniform(kw, (word_embed_size, char_embed_size, kernel_size),
                                jnp.float32, -limit, limit)
    bias = jax.random.uniform(kb, (word_embed_size,), jnp.float32, -limit, limit)

    y = cnn_forward(x, weight, bias, padding=padding)
    y = jax.block_until_ready(y)

    # Compare against a reference computed on bf16-rounded operands (the kernel
    # uses bf16 MXU operands with f32 accumulation), so the comparison is tight.
    x_q = x.astype(jnp.bfloat16).astype(jnp.float32)
    w_q = weight.astype(jnp.bfloat16).astype(jnp.float32)
    y_ref = _reference(x_q, w_q, bias, padding=padding)

    assert y.shape == (batch, word_embed_size)
    assert jnp.allclose(y, y_ref, atol=1e-2, rtol=1e-2), "mismatch vs reference"

    print("KERNEL_OK")
</pallas_src>

<mosaic_0001>
module attributes {stable_mosaic.version = 11 : i64} {
  func.func @_cnn_kernel(%arg0: i32, %arg1: memref<8x16x40xbf16, #tpu.memory_space<vmem>>, %arg2: memref<40x128xbf16, #tpu.memory_space<vmem>>, %arg3: memref<1x128xf32, #tpu.memory_space<vmem>>, %arg4: memref<8x128xf32, #tpu.memory_space<vmem>>) attributes {dimension_semantics = [#tpu.dimension_semantics<parallel>], iteration_bounds = array<i64: 1>, scalar_prefetch = 0 : i64, scratch_operands = 0 : i64, tpu.core_type = #tpu.core_type<tc>, window_params = [{transform_indices = @transform_0, window_bounds = array<i64: 8, 16, 40>}, {pipeline_mode = #tpu.pipeline_mode<synchronous>, transform_indices = @transform_1, window_bounds = array<i64: 40, 128>}, {pipeline_mode = #tpu.pipeline_mode<synchronous>, transform_indices = @transform_2, window_bounds = array<i64: 1, 128>}, {transform_indices = @transform_3, window_bounds = array<i64: 8, 128>}]} {
    %c0 = arith.constant 0 : index
    %c0_0 = arith.constant 0 : index
    %c0_1 = arith.constant 0 : index
    %0 = vector.load %arg1[%c0, %c0_0, %c0_1] : memref<8x16x40xbf16, #tpu.memory_space<vmem>>, vector<8x16x40xbf16>
    %1 = vector.shape_cast %0 : vector<8x16x40xbf16> to vector<128x40xbf16>
    %c0_2 = arith.constant 0 : index
    %c0_3 = arith.constant 0 : index
    %2 = vector.load %arg2[%c0_2, %c0_3] : memref<40x128xbf16, #tpu.memory_space<vmem>>, vector<40x128xbf16>
    %cst = arith.constant dense<0.000000e+00> : vector<128x128xf32>
    %3 = tpu.matmul %1, %2, %cst {dimension_numbers = #tpu.dot_dimension_numbers<[1], [0], [0], [1], [0, 0, 1, 1], [], []>} : vector<128x40xbf16>, vector<40x128xbf16>, vector<128x128xf32> -> vector<128x128xf32>
    %4 = vector.shape_cast %3 : vector<128x128xf32> to vector<8x16x128xf32>
    %cst_4 = arith.constant dense<0xFF800000> : vector<8x128xf32>
    %5 = vector.multi_reduction <maximumf>, %4, %cst_4 [1] : vector<8x16x128xf32> to vector<8x128xf32>
    %c0_5 = arith.constant 0 : index
    %c0_6 = arith.constant 0 : index
    %6 = vector.load %arg3[%c0_5, %c0_6] : memref<1x128xf32, #tpu.memory_space<vmem>>, vector<1x128xf32>
    %7 = vector.broadcast %6 : vector<1x128xf32> to vector<8x128xf32>
    %8 = arith.addf %5, %7 : vector<8x128xf32>
    %cst_7 = arith.constant 0.000000e+00 : f32
    %9 = vector.broadcast %cst_7 : f32 to vector<8x128xf32>
    %10 = arith.maximumf %8, %9 : vector<8x128xf32>
    %c0_8 = arith.constant 0 : index
    %c0_9 = arith.constant 0 : index
    %11 = vector.load %arg4[%c0_8, %c0_9] : memref<8x128xf32, #tpu.memory_space<vmem>>, vector<8x128xf32>
    tpu.vector_store %arg4[%c0_8, %c0_9], %10 {strides = array<i32>} : memref<8x128xf32, #tpu.memory_space<vmem>>, vector<8x128xf32>,
    return
  }
  func.func @transform_0(%arg0: i32) -> (i32, i32, i32) {
    %c0_i32 = arith.constant 0 : i32
    %c0_i32_0 = arith.constant 0 : i32
    %c0_i32_1 = arith.constant 0 : i32
    return %arg0, %c0_i32, %c0_i32_0 : i32, i32, i32
  }
  func.func @transform_1(%arg0: i32) -> (i32, i32) {
    %c0_i32 = arith.constant 0 : i32
    %c0_i32_0 = arith.constant 0 : i32
    %c0_i32_1 = arith.constant 0 : i32
    return %c0_i32, %c0_i32_0 : i32, i32
  }
  func.func @transform_2(%arg0: i32) -> (i32, i32) {
    %c0_i32 = arith.constant 0 : i32
    %c0_i32_0 = arith.constant 0 : i32
    %c0_i32_1 = arith.constant 0 : i32
    return %c0_i32, %c0_i32_0 : i32, i32
  }
  func.func @transform_3(%arg0: i32) -> (i32, i32) {
    %c0_i32 = arith.constant 0 : i32
    %c0_i32_0 = arith.constant 0 : i32
    return %arg0, %c0_i32 : i32, i32
  }
}

</mosaic_0001>

<llo_original>
// kernel: tpu_custom_call.1
$region0: #{tpu_custom_call.1}
  #allocation0 [shape = 'u32[]', space=smem, size = 0x4, offset = 0x4, fixed_abs, tag = 'smem constant byte address 0x4 - core index']
  #allocation1 [shape = 'u32[144,128]{1,0:T(1,128)}', space=vmem, size = 0x12000, scoped, tag = 'internal scratch']
  %s0 = inlined_call_operand.hbm [shape: bf16[8,16,40], index: 0, kind: input, shape index: {}]
  %s1 = inlined_call_operand.hbm [shape: bf16[40,128], index: 1, kind: input, shape index: {}]
  %s2 = inlined_call_operand.vmem [shape: f32[1,128], index: 2, kind: input, shape index: {}]
  %s3 = inlined_call_operand.hbm [shape: f32[8,128], index: 3, kind: output, shape index: {}]
  %s4 = sld [smem:[#allocation0]]
  $region30: #{tpu_custom_call.1} parent=0
    _
  %s6 = ssub.s32 1, %s4
  %s7 = scalar_select 0, %s6, %s4
  $region1: #{tpu_custom_call.1} parent=0
    #allocation2 [shape = 'u8[32768]{0}', space=vmem, size = 0x8000, scoped, tag = 'input window, operand 0, single buffered']
    #allocation3 [shape = 's32[1]{0}', space=sflag, size = 0x4, scoped, tag = 'scoped memory for tpu_custom_call.1']
    #allocation4 [shape = 's32[1]{0}', space=sflag, size = 0x4, scoped, tag = 'scoped memory for tpu_custom_call.1']
    #allocation5 [shape = 'u8[10240]{0}', space=vmem, size = 0x2800, scoped, tag = 'input window, operand 1, single buffered']
    #allocation6 [shape = 's32[1]{0}', space=sflag, size = 0x4, scoped, tag = 'scoped memory for tpu_custom_call.1']
    #allocation7 [shape = 'u8[4096]{0}', space=vmem, size = 0x1000, scoped, tag = 'output window, operand 0, single buffered']
    %8 = vsyncpa [#allocation3], 0
    %9 = vsyncpa [#allocation6], 0
    %10 = vsyncpa [#allocation4], 0
    // Predicated region
    $region2: #{tpu_custom_call.1} parent=1 // pred_check
      _
    $region3: #{tpu_custom_call.1} parent=1 // pred_check_branch
      %12 = sbr.rel (0) target = $region5
    $region4: #{tpu_custom_call.1} parent=1 // pred_region
      %s14 = ssub.s32 1024, 1024
      %15 = vsyncadd [#allocation3], %s14
      %s16 = sshll.u32 [#allocation2], 4
      %s17 = int_to_ptr.vmem [resolvable:$true] %s16
      %22 = dma.hbm_to_vmem [thread:$0]  %s0, 1024, %s17, [#allocation3], 64, 64, 4
    $region5: #{tpu_custom_call.1} parent=1 // pred_fallthru
      _
    // Predicated region
    $region6: #{tpu_custom_call.1} parent=1 // pred_check
      _
    $region7: #{tpu_custom_call.1} parent=1 // pred_check_branch
      %24 = sbr.rel (0) target = $region9
    $region8: #{tpu_custom_call.1} parent=1 // pred_region
      %s26 = ssub.s32 320, 320
      %27 = vsyncadd [#allocation6], %s26
      %s28 = sshll.u32 [#allocation5], 4
      %s29 = int_to_ptr.vmem [resolvable:$true] %s28
      %34 = dma.hbm_to_vmem [thread:$0]  %s1, 320, %s29, [#allocation6], 64, 64, 4
    $region9: #{tpu_custom_call.1} parent=1 // pred_fallthru
      _
    // Predicated region
    $region10: #{tpu_custom_call.1} parent=1 // pred_check
      _
    $region11: #{tpu_custom_call.1} parent=1 // pred_check_branch
      %36 = sbr.rel (0) target = $region13
    $region12: #{tpu_custom_call.1} parent=1 // pred_region
      _
    $region13: #{tpu_custom_call.1} parent=1 // pred_fallthru
      _
    // Predicated region
    $region14: #{tpu_custom_call.1} parent=1 // pred_check
      _
    $region15: #{tpu_custom_call.1} parent=1 // pred_check_branch
      %38 = sbr.rel (0) target = $region17
    $region16: #{tpu_custom_call.1} parent=1 // pred_region
      %39 = dma.done [#allocation3], 1024
    $region17: #{tpu_custom_call.1} parent=1 // pred_fallthru
      _
    // Predicated region
    $region18: #{tpu_custom_call.1} parent=1 // pred_check
      _
    $region19: #{tpu_custom_call.1} parent=1 // pred_check_branch
      %41 = sbr.rel (0) target = $region21
    $region20: #{tpu_custom_call.1} parent=1 // pred_region
      %42 = dma.done [#allocation6], 320
    $region21: #{tpu_custom_call.1} parent=1 // pred_fallthru
      _
    %v44 = vld [vmem:[#allocation2] sm:$0xf]
    %v45 = vld [vmem:[#allocation2 + $0x4] sm:$0xf]
    %v46 = vld [vmem:[#allocation2 + $0x8] sm:$0xf]
    %v47 = vld [vmem:[#allocation2 + $0xc] sm:$0xf]
    %v48 = vld [vmem:[#allocation2 + $0x10] sm:$0xf]
    %v49 = vld [vmem:[#allocation2 + $0x14] sm:$0xf]
    %v50 = vld [vmem:[#allocation2 + $0x18] sm:$0xf]
    %v51 = vld [vmem:[#allocation2 + $0x1c] sm:$0xf]
    %v52 = vld [vmem:[#allocation2 + $0x20] sm:$0xf]
    %v53 = vld [vmem:[#allocation2 + $0x24] sm:$0xf]
    %v54 = vld [vmem:[#allocation2 + $0x28] sm:$0xf]
    %v55 = vld [vmem:[#allocation2 + $0x2c] sm:$0xf]
    %v56 = vld [vmem:[#allocation2 + $0x30] sm:$0xf]
    %v57 = vld [vmem:[#allocation2 + $0x34] sm:$0xf]
    %v58 = vld [vmem:[#allocation2 + $0x38] sm:$0xf]
    %v59 = vld [vmem:[#allocation2 + $0x3c] sm:$0xf]
    %v60 = vld [vmem:[#allocation5] sm:$0xf]
    %v61 = vld [vmem:[#allocation5 + $0x4] sm:$0xf]
    %v62 = vld [vmem:[#allocation5 + $0x8] sm:$0xf]
    %v63 = vld [vmem:[#allocation5 + $0xc] sm:$0xf]
    %v64 = vld [vmem:[#allocation5 + $0x10] sm:$0xf]
    %v81 = vunpack.c.l.b16 %v44
    %v82 = vunpack.c.l.b16 %v45
    %v83 = vunpack.c.l.b16 %v46
    %v84 = vunpack.c.l.b16 %v47
    %v85 = vunpack.c.l.b16 %v48
    %v86 = vunpack.c.l.b16 %v49
    %v87 = vunpack.c.l.b16 %v50
    %v88 = vunpack.c.l.b16 %v51
    %v89 = vunpack.c.l.b16 %v52
    %v90 = vunpack.c.l.b16 %v53
    %v91 = vunpack.c.l.b16 %v54
    %v92 = vunpack.c.l.b16 %v55
    %v93 = vunpack.c.l.b16 %v56
    %v94 = vunpack.c.l.b16 %v57
    %v95 = vunpack.c.l.b16 %v58
    %v96 = vunpack.c.l.b16 %v59
    %v97 = vpack.c.b16 %v82, %v81
    %v98 = vpack.c.b16 %v84, %v83
    %v99 = vpack.c.b16 %v86, %v85
    %v100 = vpack.c.b16 %v88, %v87
    %v101 = vpack.c.b16 %v90, %v89
    %v102 = vpack.c.b16 %v92, %v91
    %v103 = vpack.c.b16 %v94, %v93
    %v104 = vpack.c.b16 %v96, %v95
    %v110 = vunpack.c.l.b16 %v60
    %v111 = vunpack.c.l.b16 %v61
    %v112 = vunpack.c.l.b16 %v62
    %v113 = vunpack.c.l.b16 %v63
    %v114 = vunpack.c.l.b16 %v64
    %v115 = vpack.c.b16 %v111, %v110
    %v116 = vpack.c.b16 %v113, %v112
    %v117 = vpack.c.b16 %v114, %v114
    %vm120 = vcmask 326656
    %v122 = vsel %vm120, %v97, 0
    %v125 = vsel %vm120, %v98, 0
    %v128 = vsel %vm120, %v99, 0
    %v131 = vsel %vm120, %v100, 0
    %v134 = vsel %vm120, %v101, 0
    %v137 = vsel %vm120, %v102, 0
    %v140 = vsel %vm120, %v103, 0
    %v143 = vsel %vm120, %v104, 0
    %vm145 = vcmask 1043456
    %v147 = vsel %vm145, %v117, 0
    %149 = vmatprep.subr.bf16.mxu0 0
    %150 = vmatpush1.bf16.msra.mxu0 0
    %151 = vmatprep.subr.bf16.mxu0 0
    %152 = vmatpush1.bf16.msra.mxu0 0
    %153 = vmatprep.subr.bf16.mxu0 0
    %154 = vmatpush1.bf16.msra.mxu0 0
    %155 = vmatprep.subr.bf16.mxu0 0
    %156 = vmatpush1.bf16.msra.mxu0 0
    %157 = vmatprep.subr.bf16.mxu0 0
    %158 = vmatpush1.bf16.msra.mxu0 0
    %159 = vmatprep.subr.bf16.mxu0 0
    %160 = vmatpush1.bf16.msra.mxu0 %v147
    %161 = vmatprep.subr.bf16.mxu0 0
    %162 = vmatpush1.bf16.msra.mxu0 %v116
    %163 = vmatprep.subr.bf16.mxu0 0
    %164 = vmatpush1.bf16.msra.mxu0 %v115
    %165 = vmatprep.subr.bf16.mxu0 0
    %166 = vmatpush2.bf16.msra.mxu0 0
    %167 = vmatprep.subr.bf16.mxu0 0
    %168 = vmatpush2.bf16.msra.mxu0 0
    %169 = vmatprep.subr.bf16.mxu0 0
    %170 = vmatpush2.bf16.msra.mxu0 0
    %171 = vmatprep.subr.bf16.mxu0 0
    %172 = vmatpush2.bf16.msra.mxu0 0
    %173 = vmatprep.subr.bf16.mxu0 0
    %174 = vmatpush2.bf16.msra.mxu0 0
    %175 = vmatprep.subr.bf16.mxu0 0
    %176 = vmatpush2.bf16.msra.mxu0 0
    %177 = vmatprep.subr.bf16.mxu0 0
    %178 = vmatpush2.bf16.msra.mxu0 0
    %179 = vmatprep.subr.bf16.mxu0 0
    %180 = vmatpush2.bf16.msra.mxu0 0
    %181 = vmatprep.mubr.bf16.mxu0 0
    %182 = vmatmul.mubr.bf16.gmra.mxu0 %v122
    %v183 = vpop.f32.mrf.mxu0
    %v184 = vadd.f32 0.0, %v183
    %v185 = vpop.f32.mrf.mxu0
    %v186 = vpop.f32.mrf.mxu0
    %v187 = vadd.f32 0.0, %v186
    %v188 = vpop.f32.mrf.mxu0
    %189 = vmatprep.mubr.bf16.mxu0 0
    %190 = vmatmul.mubr.bf16.gmra.mxu0 %v125
    %v191 = vpop.f32.mrf.mxu0
    %v192 = vadd.f32 0.0, %v191
    %v193 = vpop.f32.mrf.mxu0
    %v194 = vpop.f32.mrf.mxu0
    %v195 = vadd.f32 0.0, %v194
    %v196 = vpop.f32.mrf.mxu0
    %197 = vmatprep.mubr.bf16.mxu0 0
    %198 = vmatmul.mubr.bf16.gmra.mxu0 %v128
    %v199 = vpop.f32.mrf.mxu0
    %v200 = vadd.f32 0.0, %v199
    %v201 = vpop.f32.mrf.mxu0
    %v202 = vpop.f32.mrf.mxu0
    %v203 = vadd.f32 0.0, %v202
    %v204 = vpop.f32.mrf.mxu0
    %205 = vmatprep.mubr.bf16.mxu0 0
    %206 = vmatmul.mubr.bf16.gmra.mxu0 %v131
    %v207 = vpop.f32.mrf.mxu0
    %v208 = vadd.f32 0.0, %v207
    %v209 = vpop.f32.mrf.mxu0
    %v210 = vpop.f32.mrf.mxu0
    %v211 = vadd.f32 0.0, %v210
    %v212 = vpop.f32.mrf.mxu0
    %213 = vmatprep.mubr.bf16.mxu0 0
    %214 = vmatmul.mubr.bf16.gmra.mxu0 %v134
    %v215 = vpop.f32.mrf.mxu0
    %v216 = vadd.f32 0.0, %v215
    %v217 = vpop.f32.mrf.mxu0
    %v218 = vpop.f32.mrf.mxu0
    %v219 = vadd.f32 0.0, %v218
    %v220 = vpop.f32.mrf.mxu0
    %221 = vmatprep.mubr.bf16.mxu0 0
    %222 = vmatmul.mubr.bf16.gmra.mxu0 %v137
    %v223 = vpop.f32.mrf.mxu0
    %v224 = vadd.f32 0.0, %v223
    %v225 = vpop.f32.mrf.mxu0
    %v226 = vpop.f32.mrf.mxu0
    %v227 = vadd.f32 0.0, %v226
    %v228 = vpop.f32.mrf.mxu0
    %229 = vmatprep.mubr.bf16.mxu0 0
    %230 = vmatmul.mubr.bf16.gmra.mxu0 %v140
    %v231 = vpop.f32.mrf.mxu0
    %v232 = vadd.f32 0.0, %v231
    %v233 = vpop.f32.mrf.mxu0
    %v234 = vpop.f32.mrf.mxu0
    %v235 = vadd.f32 0.0, %v234
    %v236 = vpop.f32.mrf.mxu0
    %237 = vmatprep.mubr.bf16.mxu0 0
    %238 = vmatmul.mubr.bf16.gmra.mxu0 %v143
    %v239 = vpop.f32.mrf.mxu0
    %v240 = vadd.f32 0.0, %v239
    %v241 = vpop.f32.mrf.mxu0
    %v242 = vpop.f32.mrf.mxu0
    %v243 = vadd.f32 0.0, %v242
    %v244 = vpop.f32.mrf.mxu0
    %245 = vdwg.mxu0
    %v246 = vmax.f32 %v184, %v187
    %v247 = vrot.slane %v246, 4
    %v248 = vmax.f32 %v246, %v247
    %v249 = vrot.slane %v248, 2
    %v250 = vmax.f32 %v248, %v249
    %v251 = vrot.slane %v250, 1
    %v252 = vmax.f32 %v250, %v251
    %v253 = vmax.f32 %v192, %v195
    %v254 = vrot.slane %v253, 4
    %v255 = vmax.f32 %v253, %v254
    %v256 = vrot.slane %v255, 2
    %v257 = vmax.f32 %v255, %v256
    %v258 = vrot.slane %v257, 1
    %v259 = vmax.f32 %v257, %v258
    %v260 = vmax.f32 %v200, %v203
    %v261 = vrot.slane %v260, 4
    %v262 = vmax.f32 %v260, %v261
    %v263 = vrot.slane %v262, 2
    %v264 = vmax.f32 %v262, %v263
    %v265 = vrot.slane %v264, 1
    %v266 = vmax.f32 %v264, %v265
    %v267 = vmax.f32 %v208, %v211
    %v268 = vrot.slane %v267, 4
    %v269 = vmax.f32 %v267, %v268
    %v270 = vrot.slane %v269, 2
    %v271 = vmax.f32 %v269, %v270
    %v272 = vrot.slane %v271, 1
    %v273 = vmax.f32 %v271, %v272
    %v274 = vmax.f32 %v216, %v219
    %v275 = vrot.slane %v274, 4
    %v276 = vmax.f32 %v274, %v275
    %v277 = vrot.slane %v276, 2
    %v278 = vmax.f32 %v276, %v277
    %v279 = vrot.slane %v278, 1
    %v280 = vmax.f32 %v278, %v279
    %v281 = vmax.f32 %v224, %v227
    %v282 = vrot.slane %v281, 4
    %v283 = vmax.f32 %v281, %v282
    %v284 = vrot.slane %v283, 2
    %v285 = vmax.f32 %v283, %v284
    %v286 = vrot.slane %v285, 1
    %v287 = vmax.f32 %v285, %v286
    %v288 = vmax.f32 %v232, %v235
    %v289 = vrot.slane %v288, 4
    %v290 = vmax.f32 %v288, %v289
    %v291 = vrot.slane %v290, 2
    %v292 = vmax.f32 %v290, %v291
    %v293 = vrot.slane %v292, 1
    %v294 = vmax.f32 %v292, %v293
    %v295 = vmax.f32 %v240, %v243
    %v296 = vrot.slane %v295, 4
    %v297 = vmax.f32 %v295, %v296
    %v298 = vrot.slane %v297, 2
    %v299 = vmax.f32 %v297, %v298
    %v300 = vrot.slane %v299, 1
    %v301 = vmax.f32 %v299, %v300
    %v302 = vld [vmem:[%s2] sm:$0x1]
    %v304 = vlaneseq
    %v305 = vshrl.u32 %v304, 7
    %v306 = vsub.s32 0, %v305
    %v307 = vrot.slane %v302, %v306
    %v309 = vadd.f32 %v252, %v307
    %v310 = vadd.f32 %v259, %v307
    %v311 = vadd.f32 %v266, %v307
    %v312 = vadd.f32 %v273, %v307
    %v313 = vadd.f32 %v280, %v307
    %v314 = vadd.f32 %v287, %v307
    %v315 = vadd.f32 %v294, %v307
    %v316 = vadd.f32 %v301, %v307
    %v317 = vmax.f32 %v309, 0.0
    %v318 = vmax.f32 %v310, 0.0
    %v319 = vmax.f32 %v311, 0.0
    %v320 = vmax.f32 %v312, 0.0
    %v321 = vmax.f32 %v313, 0.0
    %v322 = vmax.f32 %v314, 0.0
    %v323 = vmax.f32 %v315, 0.0
    %v324 = vmax.f32 %v316, 0.0
    %v333 = vrot.slane %v318, 7
    %vm334 = vcmask 1041409
    %v335 = vsel %vm334, %v333, %v317
    %v336 = vrot.slane %v319, 6
    %vm337 = vcmask 1042434
    %v338 = vsel %vm337, %v336, %v335
    %v339 = vrot.slane %v320, 5
    %vm340 = vcmask 1043459
    %v341 = vsel %vm340, %v339, %v338
    %v342 = vrot.slane %v321, 4
    %vm343 = vcmask 1044484
    %v344 = vsel %vm343, %v342, %v341
    %v345 = vrot.slane %v322, 3
    %vm346 = vcmask 1045509
    %v347 = vsel %vm346, %v345, %v344
    %v348 = vrot.slane %v323, 2
    %vm349 = vcmask 1046534
    %v350 = vsel %vm349, %v348, %v347
    %v351 = vrot.slane %v324, 1
    %vm352 = vcmask 1047559
    %v353 = vsel %vm352, %v351, %v350
    %355 = vst [vmem:[#allocation7] sm:$0xff] %v353
    // Predicated region
    $region22: #{tpu_custom_call.1} parent=1 // pred_check
      _
    $region23: #{tpu_custom_call.1} parent=1 // pred_check_branch
      %357 = sbr.rel (0) target = $region25
    $region24: #{tpu_custom_call.1} parent=1 // pred_region
      %s359 = ssub.s32 128, 128
      %360 = vsyncadd [#allocation4], %s359
      %s362 = sshll.u32 [#allocation7], 4
      %s363 = int_to_ptr.vmem [resolvable:$true] %s362
      %365 = dma.vmem_to_hbm [thread:$0]  %s363, 128, %s3, [#allocation4]
    $region25: #{tpu_custom_call.1} parent=1 // pred_fallthru
      _
    // Predicated region
    $region26: #{tpu_custom_call.1} parent=1 // pred_check
      _
    $region27: #{tpu_custom_call.1} parent=1 // pred_check_branch
      %367 = sbr.rel (0) target = $region29
    $region28: #{tpu_custom_call.1} parent=1 // pred_region
      %368 = dma.done [#allocation4], 128
    $region29: #{tpu_custom_call.1} parent=1 // pred_fallthru
      _
    %369 = vsyncpa [#allocation3], 1
    %370 = vsyncpa [#allocation6], 1
    %371 = vsyncpa [#allocation4], 1

</llo_original>
